<compile_context>
chip_gen: v7x
topology: tpu7x:2x2x1
jax: 0.10.0
libtpu: 0.0.40
codegen_flags: <defaults>
</compile_context>

<pallas_src>
import jax
import jax.numpy as jnp
from jax import lax
from jax.experimental import pallas as pl
from jax.experimental.pallas import tpu as pltpu

LANE = 128
_LARGE_VOCAB_THRESHOLD = 4096  # above this, multihot@MXU is wasteful -> gather path


def _round_up(x, m):
    return ((x + m - 1) // m) * m


# ----------------------------------------------------------------------------
# Pallas kernel: fused multi-hot embedding(-bag) lookup as one MXU matmul.
#
#   idx_ref : (tile_n, C) int32  -- indices already offset into the fused vocab
#   tab_ref : (V_pad, E_pad)     -- block-diagonal fused embedding table
#   out_ref : (tile_n, E_pad)    -- lane-dense concatenated embeddings
#
# counts[n, v] = #{c : idx[n, c] == v}, accumulated column-by-column with 2-D
# one-hots (unrolled over the few categorical columns), then
# out = counts @ fused_table on the MXU with f32 accumulation.
# ----------------------------------------------------------------------------
def _fused_embedding_kernel(idx_ref, tab_ref, out_ref):
    idx = idx_ref[...]                                    # (tile_n, C) int32
    tn, c = idx.shape
    v_pad = tab_ref.shape[0]
    acc_dtype = tab_ref.dtype
    iota_v = lax.broadcasted_iota(jnp.int32, (tn, v_pad), 1)
    counts = jnp.zeros((tn, v_pad), dtype=acc_dtype)
    for ci in range(c):                                   # C is tiny -> unroll
        counts = counts + (idx[:, ci:ci + 1] == iota_v).astype(acc_dtype)
    out_ref[...] = jnp.dot(
        counts, tab_ref[...], preferred_element_type=jnp.float32
    ).astype(out_ref.dtype)


def fused_embedding_forward(idx, fused_table, *, tile_n=512):
    """idx: (N, C) int32 (already vocab-offset); fused_table: (V_pad, E_pad).

    Returns (N, E_pad) float32 = multihot(idx) @ fused_table.
    """
    n, c = idx.shape
    v_pad, e_pad = fused_table.shape
    itemsize = jnp.dtype(fused_table.dtype).itemsize

    # Big tiles amortize the ~0.35us/step grid overhead; only shrink if the
    # working set would not fit comfortably in VMEM on the smallest generation.
    tile_n = max(8, min(int(tile_n), _round_up(n, 8)))

    def _est(t):
        io = 2 * (t * c * 4 + t * e_pad * 4)              # double-buffered idx + out
        tmp = 2 * t * v_pad * itemsize                    # counts + one-hot temporaries
        return io + tmp + v_pad * e_pad * itemsize        # + resident fused table

    budget = 40 << 20                                     # safe under v7x's 64 MiB
    while tile_n > 64 and _est(tile_n) > budget:
        tile_n //= 2
    tile_n = max(8, _round_up(tile_n, 8))

    vmem_limit = int(min(max(2 * _est(tile_n) + (4 << 20), 32 << 20), 48 << 20))

    return pl.pallas_call(
        _fused_embedding_kernel,
        out_shape=jax.ShapeDtypeStruct((n, e_pad), jnp.float32),
        grid_spec=pltpu.PrefetchScalarGridSpec(
            num_scalar_prefetch=0,
            grid=(pl.cdiv(n, tile_n),),
            in_specs=[
                pl.BlockSpec((tile_n, c), lambda i: (i, 0)),     # index tile
                pl.BlockSpec((v_pad, e_pad), lambda i: (0, 0)),  # resident fused table
            ],
            out_specs=pl.BlockSpec((tile_n, e_pad), lambda i: (i, 0)),
        ),
        compiler_params=pltpu.CompilerParams(
            dimension_semantics=("parallel",),   # lets v7x shard N over both TCs
            vmem_limit_bytes=vmem_limit,
        ),
    )(idx, fused_table)


# ----------------------------------------------------------------------------
# MultiEmbedding glue (parameter setup / fused-layout metadata in plain JAX)
# ----------------------------------------------------------------------------
def get_embedding_size(n: int, max_size: int = 100) -> int:
    # pytorch_forecasting.utils.get_embedding_size
    if n > 2:
        return min(round(1.6 * n ** 0.56), max_size)
    return 1


class MultiEmbedding:
    def __init__(self, embedding_sizes, x_categoricals=None,
                 categorical_groups=None, embedding_paddings=None,
                 max_embedding_size=None, *, key,
                 use_bf16_table=False, tile_n=512):
        if categorical_groups is None:
            categorical_groups = {}
        if embedding_paddings is None:
            embedding_paddings = []

        if isinstance(embedding_sizes, dict):
            self.concat_output = False
            assert x_categoricals is not None
        else:
            assert x_categoricals is None and len(categorical_groups) == 0
            embedding_sizes = {str(i): s for i, s in enumerate(embedding_sizes)}
            x_categoricals = list(embedding_sizes.keys())
            self.concat_output = True

        self.embedding_sizes = {
            name: list((size, get_embedding_size(size)) if isinstance(size, int)
                       else size)
            for name, size in embedding_sizes.items()
        }
        self.categorical_groups = categorical_groups
        self.embedding_paddings = embedding_paddings
        self.max_embedding_size = max_embedding_size
        self.x_categoricals = x_categoricals
        self.tile_n = tile_n

        # --- per-name parameter init (nn.Embedding / nn.EmbeddingBag: N(0,1)) ---
        self.tables = {}
        self._name_cols = {}
        for name in self.embedding_sizes:
            emb_size = self.embedding_sizes[name][1]
            if self.max_embedding_size is not None:
                emb_size = min(emb_size, self.max_embedding_size)
            self.embedding_sizes[name][1] = emb_size
            vocab = self.embedding_sizes[name][0]
            key, sub = jax.random.split(key)
            table = jax.random.normal(sub, (vocab, emb_size), dtype=jnp.float32)
            if (name not in self.categorical_groups
                    and name in self.embedding_paddings):
                table = table.at[0].set(0.0)              # padding_idx=0
            self.tables[name] = table
            if name in self.categorical_groups:
                cols = [self.x_categoricals.index(c)
                        for c in self.categorical_groups[name]]
            else:
                cols = [self.x_categoricals.index(name)]
            self._name_cols[name] = cols

        # --- fused block-diagonal layout for all small-vocab names ---
        self._small_names = [nm for nm in self.embedding_sizes
                             if self.embedding_sizes[nm][0] <= _LARGE_VOCAB_THRESHOLD]
        self._large_names = [nm for nm in self.embedding_sizes
                             if nm not in self._small_names]

        col_order, col_voff = [], []
        self._e_slices = {}
        v_off, e_off = 0, 0
        for name in self._small_names:
            vocab, emb = self.embedding_sizes[name]
            cols = self._name_cols[name]
            col_order.extend(cols)
            col_voff.extend([v_off] * len(cols))
            self._e_slices[name] = (e_off, emb)
            v_off += vocab
            e_off += emb
        self._e_total = e_off
        self._col_order = col_order
        self._col_voff = col_voff

        if self._small_names:
            table_dtype = jnp.bfloat16 if use_bf16_table else jnp.float32
            v_pad = _round_up(max(v_off, 1), LANE)   # contraction dim >= 128
            e_pad = _round_up(max(e_off, 1), LANE)   # lane-dense output width
            fused = jnp.zeros((v_pad, e_pad), dtype=table_dtype)
            v_cur, e_cur = 0, 0
            for name in self._small_names:
                vocab, emb = self.embedding_sizes[name]
                fused = fused.at[v_cur:v_cur + vocab, e_cur:e_cur + emb].set(
                    self.tables[name].astype(table_dtype))
                v_cur += vocab
                e_cur += emb
            self._fused_table = fused
        else:
            self._fused_table = None

    @property
    def output_size(self):
        if self.concat_output:
            return sum(s[1] for s in self.embedding_sizes.values())
        return {name: s[1] for name, s in self.embedding_sizes.items()}

    def __call__(self, x):
        """x: int array of shape batch x (optional) time x categoricals."""
        lead_shape = x.shape[:-1]
        n_rows = 1
        for d in lead_shape:
            n_rows *= int(d)

        outputs = {}
        slab = None
        if self._small_names:
            cols = jnp.asarray(self._col_order, dtype=jnp.int32)
            voff = jnp.asarray(self._col_voff, dtype=jnp.int32)
            idx = jnp.take(x, cols, axis=-1).astype(jnp.int32) + voff
            idx = idx.reshape(n_rows, len(self._col_order))
            slab = fused_embedding_forward(idx, self._fused_table,
                                           tile_n=self.tile_n)
            slab = slab.reshape(*lead_shape, slab.shape[-1])
            for name in self._small_names:
                off, sz = self._e_slices[name]
                outputs[name] = slab[..., off:off + sz]

        for name in self._large_names:
            # TODO(synk): manual DMA-gather Pallas path (scalar-prefetched row ids +
            # make_async_copy on an HBM-resident table) for huge vocabularies; pure-JAX
            # gather keeps semantics for now.
            tab = self.tables[name]
            cols = self._name_cols[name]
            if name in self.categorical_groups:
                outputs[name] = jnp.take(tab, x[..., jnp.asarray(cols)],
                                         axis=0).sum(axis=-2)
            else:
                outputs[name] = jnp.take(tab, x[..., cols[0]], axis=0)

        if self.concat_output:
            if not self._large_names and slab is not None:
                # fused output is already laid out in name order -> contiguous slice
                return slab[..., : self._e_total]
            return jnp.concatenate([outputs[name] for name in self.embedding_sizes],
                                   axis=-1)
        return {name: outputs[name] for name in self.embedding_sizes}


# ----------------------------------------------------------------------------
# Pure-JAX reference for verification
# ----------------------------------------------------------------------------
def _reference(module, x):
    out = {}
    for name in module.embedding_sizes:
        tab = module.tables[name]
        cols = module._name_cols[name]
        if name in module.categorical_groups:
            out[name] = jnp.take(tab, x[..., jnp.asarray(cols)], axis=0).sum(axis=-2)
        else:
            out[name] = jnp.take(tab, x[..., cols[0]], axis=0)
    if module.concat_output:
        return jnp.concatenate(list(out.values()), axis=-1)
    return out


if __name__ == "__main__":
    key = jax.random.PRNGKey(0)

    # categoricals: cat1 (plain nn.Embedding, padded), group1 = bag-sum of cat2 & cat3
    embedding_sizes = {"cat1": (10, 3), "group1": (12, 4)}
    categorical_groups = {"group1": ["cat2", "cat3"]}
    x_categoricals = ["cat1", "cat2", "cat3"]
    embedding_paddings = ["cat1"]

    k_params, k_x1, k_x2 = jax.random.split(key, 3)
    module = MultiEmbedding(
        embedding_sizes,
        x_categoricals=x_categoricals,
        categorical_groups=categorical_groups,
        embedding_paddings=embedding_paddings,
        key=k_params,
    )

    # batch=2, time=8, categoricals=3
    B, T = 2, 8
    x_cat1 = jax.random.randint(k_x1, (B, T, 1), 0, 10)
    x_grp = jax.random.randint(k_x2, (B, T, 2), 0, 12)
    x = jnp.concatenate([x_cat1, x_grp], axis=-1).astype(jnp.int32)  # (2, 8, 3)

    out = module(x)
    out = jax.block_until_ready(out)

    ref = _reference(module, x)
    for name in out:
        assert out[name].shape == ref[name].shape, (name, out[name].shape)
        assert jnp.allclose(out[name], ref[name], atol=1e-5), name

    # list-input / concat_output path with 2-D input (batch x categoricals)
    module2 = MultiEmbedding([(10, 3), (7, 2)], key=jax.random.PRNGKey(1))
    x2 = jax.random.randint(jax.random.PRNGKey(2), (8, 2), 0, 7).astype(jnp.int32)
    out2 = jax.block_until_ready(module2(x2))
    ref2 = _reference(module2, x2)
    assert out2.shape == (8, module2.output_size)
    assert jnp.allclose(out2, ref2, atol=1e-5)

    print("KERNEL_OK")
</pallas_src>

<mosaic_0001>
module attributes {stable_mosaic.version = 11 : i64} {
  func.func @_fused_embedding_kernel(%arg0: i32, %arg1: memref<16x3xi32, #tpu.memory_space<vmem>>, %arg2: memref<128x128xf32, #tpu.memory_space<vmem>>, %arg3: memref<16x128xf32, #tpu.memory_space<vmem>>) attributes {dimension_semantics = [#tpu.dimension_semantics<parallel>], iteration_bounds = array<i64: 1>, scalar_prefetch = 0 : i64, scratch_operands = 0 : i64, tpu.core_type = #tpu.core_type<tc>, window_params = [{transform_indices = @transform_0, window_bounds = array<i64: 16, 3>}, {pipeline_mode = #tpu.pipeline_mode<synchronous>, transform_indices = @transform_1, window_bounds = array<i64: 128, 128>}, {transform_indices = @transform_2, window_bounds = array<i64: 16, 128>}]} {
    %c0 = arith.constant 0 : index
    %c0_0 = arith.constant 0 : index
    %0 = vector.load %arg1[%c0, %c0_0] : memref<16x3xi32, #tpu.memory_space<vmem>>, vector<16x3xi32>
    %1 = tpu.iota {dimensions = array<i32: 1>} : vector<16x128xi32>
    %cst = arith.constant 0.000000e+00 : f32
    %2 = vector.broadcast %cst : f32 to vector<16x128xf32>
    %3 = vector.extract_strided_slice %0 {offsets = [0, 0], sizes = [16, 1], strides = [1, 1]} : vector<16x3xi32> to vector<16x1xi32>
    %4 = vector.broadcast %3 : vector<16x1xi32> to vector<16x128xi32>
    %5 = arith.cmpi eq, %4, %1 : vector<16x128xi32>
    %6 = arith.extui %5 : vector<16x128xi1> to vector<16x128xi32>
    %7 = arith.sitofp %6 : vector<16x128xi32> to vector<16x128xf32>
    %8 = arith.addf %2, %7 : vector<16x128xf32>
    %9 = vector.extract_strided_slice %0 {offsets = [0, 1], sizes = [16, 1], strides = [1, 1]} : vector<16x3xi32> to vector<16x1xi32>
    %10 = vector.broadcast %9 : vector<16x1xi32> to vector<16x128xi32>
    %11 = arith.cmpi eq, %10, %1 : vector<16x128xi32>
    %12 = arith.extui %11 : vector<16x128xi1> to vector<16x128xi32>
    %13 = arith.sitofp %12 : vector<16x128xi32> to vector<16x128xf32>
    %14 = arith.addf %8, %13 : vector<16x128xf32>
    %15 = vector.extract_strided_slice %0 {offsets = [0, 2], sizes = [16, 1], strides = [1, 1]} : vector<16x3xi32> to vector<16x1xi32>
    %16 = vector.broadcast %15 : vector<16x1xi32> to vector<16x128xi32>
    %17 = arith.cmpi eq, %16, %1 : vector<16x128xi32>
    %18 = arith.extui %17 : vector<16x128xi1> to vector<16x128xi32>
    %19 = arith.sitofp %18 : vector<16x128xi32> to vector<16x128xf32>
    %20 = arith.addf %14, %19 : vector<16x128xf32>
    %c0_1 = arith.constant 0 : index
    %c0_2 = arith.constant 0 : index
    %21 = vector.load %arg2[%c0_1, %c0_2] : memref<128x128xf32, #tpu.memory_space<vmem>>, vector<128x128xf32>
    %cst_3 = arith.constant dense<0.000000e+00> : vector<16x128xf32>
    %22 = tpu.matmul %20, %21, %cst_3 {dimension_numbers = #tpu.dot_dimension_numbers<[1], [0], [0], [1], [0, 0, 1, 1], [], []>} : vector<16x128xf32>, vector<128x128xf32>, vector<16x128xf32> -> vector<16x128xf32>
    %c0_4 = arith.constant 0 : index
    %c0_5 = arith.constant 0 : index
    %23 = vector.load %arg3[%c0_4, %c0_5] : memref<16x128xf32, #tpu.memory_space<vmem>>, vector<16x128xf32>
    tpu.vector_store %arg3[%c0_4, %c0_5], %22 {strides = array<i32>} : memref<16x128xf32, #tpu.memory_space<vmem>>, vector<16x128xf32>,
    return
  }
  func.func @transform_0(%arg0: i32) -> (i32, i32) {
    %c0_i32 = arith.constant 0 : i32
    %c0_i32_0 = arith.constant 0 : i32
    return %arg0, %c0_i32 : i32, i32
  }
  func.func @transform_1(%arg0: i32) -> (i32, i32) {
    %c0_i32 = arith.constant 0 : i32
    %c0_i32_0 = arith.constant 0 : i32
    %c0_i32_1 = arith.constant 0 : i32
    return %c0_i32, %c0_i32_0 : i32, i32
  }
  func.func @transform_2(%arg0: i32) -> (i32, i32) {
    %c0_i32 = arith.constant 0 : i32
    %c0_i32_0 = arith.constant 0 : i32
    return %arg0, %c0_i32 : i32, i32
  }
}

</mosaic_0001>

<llo_original>
// kernel: tpu_custom_call.1
$region0: #{tpu_custom_call.1}
  #allocation0 [shape = 'u32[]', space=smem, size = 0x4, offset = 0x4, fixed_abs, tag = 'smem constant byte address 0x4 - core index']
  #allocation1 [shape = 'u32[144,128]{1,0:T(1,128)}', space=vmem, size = 0x12000, scoped, tag = 'internal scratch']
  %s0 = inlined_call_operand.vmem [shape: s32[16,3], index: 0, kind: input, shape index: {}]
  %s1 = inlined_call_operand.hbm [shape: f32[128,128], index: 1, kind: input, shape index: {}]
  %s2 = inlined_call_operand.hbm [shape: f32[16,128], index: 2, kind: output, shape index: {}]
  %s3 = sld [smem:[#allocation0]]
  $region22: #{tpu_custom_call.1} parent=0
    _
  %s5 = ssub.s32 1, %s3
  %s6 = scalar_select 0, %s5, %s3
  $region1: #{tpu_custom_call.1} parent=0
    #allocation2 [shape = 'u8[65536]{0}', space=vmem, size = 0x10000, scoped, tag = 'input window, operand 1, single buffered']
    #allocation3 [shape = 's32[1]{0}', space=sflag, size = 0x4, scoped, tag = 'scoped memory for tpu_custom_call.1']
    #allocation4 [shape = 's32[1]{0}', space=sflag, size = 0x4, scoped, tag = 'scoped memory for tpu_custom_call.1']
    #allocation5 [shape = 'u8[8192]{0}', space=vmem, size = 0x2000, scoped, tag = 'output window, operand 0, single buffered']
    %7 = vsyncpa [#allocation3], 0
    %8 = vsyncpa [#allocation4], 0
    // Predicated region
    $region2: #{tpu_custom_call.1} parent=1 // pred_check
      _
    $region3: #{tpu_custom_call.1} parent=1 // pred_check_branch
      %10 = sbr.rel (0) target = $region5
    $region4: #{tpu_custom_call.1} parent=1 // pred_region
      _
    $region5: #{tpu_custom_call.1} parent=1 // pred_fallthru
      _
    // Predicated region
    $region6: #{tpu_custom_call.1} parent=1 // pred_check
      _
    $region7: #{tpu_custom_call.1} parent=1 // pred_check_branch
      %12 = sbr.rel (0) target = $region9
    $region8: #{tpu_custom_call.1} parent=1 // pred_region
      %s14 = ssub.s32 2048, 2048
      %15 = vsyncadd [#allocation3], %s14
      %s16 = sshll.u32 [#allocation2], 4
      %s17 = int_to_ptr.vmem [resolvable:$true] %s16
      %22 = dma.hbm_to_vmem [thread:$0]  %s1, 2048, %s17, [#allocation3], 128, 128, 8
    $region9: #{tpu_custom_call.1} parent=1 // pred_fallthru
      _
    // Predicated region
    $region10: #{tpu_custom_call.1} parent=1 // pred_check
      _
    $region11: #{tpu_custom_call.1} parent=1 // pred_check_branch
      %24 = sbr.rel (0) target = $region13
    $region12: #{tpu_custom_call.1} parent=1 // pred_region
      %25 = dma.done [#allocation3], 2048
    $region13: #{tpu_custom_call.1} parent=1 // pred_fallthru
      _
    %v26 = vld [vmem:[%s0] sm:$0xff]
    %v27 = vld [vmem:[%s0 + $0x8] sm:$0xff]
    %v28 = vlaneseq
    %v29 = vand.u32 %v28, 127
    %30 = vset.pattern.permute.xlu0 0
    %31 = vperm.xlu0 %30, %v26
    %v32 = vpop.permute.xlu0 %31
    %33 = vset.pattern.permute.xlu0 0
    %34 = vperm.xlu0 %33, %v27
    %v35 = vpop.permute.xlu0 %34
    %vm36 = vcmp.eq.s32.totalorder %v32, %v29
    %vm37 = vcmp.eq.s32.totalorder %v35, %v29
    %v38 = vsel %vm36, 1, 0
    %v39 = vsel %vm37, 1, 0
    %v40 = vcvt.s32.f32 %v38
    %v41 = vcvt.s32.f32 %v39
    %v42 = vadd.f32 %v40, 0.0
    %v43 = vadd.f32 %v41, 0.0
    %44 = vset.pattern.permute.xlu0 1
    %45 = vperm.xlu0 %44, %v26
    %v46 = vpop.permute.xlu0 %45
    %47 = vset.pattern.permute.xlu0 1
    %48 = vperm.xlu0 %47, %v27
    %v49 = vpop.permute.xlu0 %48
    %vm50 = vcmp.eq.s32.totalorder %v46, %v29
    %vm51 = vcmp.eq.s32.totalorder %v49, %v29
    %v52 = vsel %vm50, 1, 0
    %v53 = vsel %vm51, 1, 0
    %v54 = vcvt.s32.f32 %v52
    %v55 = vcvt.s32.f32 %v53
    %v56 = vadd.f32 %v42, %v54
    %v57 = vadd.f32 %v43, %v55
    %58 = vset.pattern.permute.xlu0 2
    %59 = vperm.xlu0 %58, %v26
    %v60 = vpop.permute.xlu0 %59
    %61 = vset.pattern.permute.xlu0 2
    %62 = vperm.xlu0 %61, %v27
    %v63 = vpop.permute.xlu0 %62
    %vm64 = vcmp.eq.s32.totalorder %v60, %v29
    %vm65 = vcmp.eq.s32.totalorder %v63, %v29
    %v66 = vsel %vm64, 1, 0
    %v67 = vsel %vm65, 1, 0
    %v68 = vcvt.s32.f32 %v66
    %v69 = vcvt.s32.f32 %v67
    %v70 = vadd.f32 %v56, %v68
    %v71 = vadd.f32 %v57, %v69
    %v72 = vld [vmem:[#allocation2] sm:$0xff]
    %v73 = vld [vmem:[#allocation2 + $0x8] sm:$0xff]
    %v74 = vld [vmem:[#allocation2 + $0x10] sm:$0xff]
    %v75 = vld [vmem:[#allocation2 + $0x18] sm:$0xff]
    %v76 = vld [vmem:[#allocation2 + $0x20] sm:$0xff]
    %v77 = vld [vmem:[#allocation2 + $0x28] sm:$0xff]
    %v78 = vld [vmem:[#allocation2 + $0x30] sm:$0xff]
    %v79 = vld [vmem:[#allocation2 + $0x38] sm:$0xff]
    %v80 = vld [vmem:[#allocation2 + $0x40] sm:$0xff]
    %v81 = vld [vmem:[#allocation2 + $0x48] sm:$0xff]
    %v82 = vld [vmem:[#allocation2 + $0x50] sm:$0xff]
    %v83 = vld [vmem:[#allocation2 + $0x58] sm:$0xff]
    %v84 = vld [vmem:[#allocation2 + $0x60] sm:$0xff]
    %v85 = vld [vmem:[#allocation2 + $0x68] sm:$0xff]
    %v86 = vld [vmem:[#allocation2 + $0x70] sm:$0xff]
    %v87 = vld [vmem:[#allocation2 + $0x78] sm:$0xff]
    %88 = vmatprep.subr.mxu0 0.0
    %89 = vmatpush1.msra.mxu0 %v72
    %90 = vmatprep.subr.mxu0 0.0
    %91 = vmatpush1.msra.mxu0 %v73
    %92 = vmatprep.subr.mxu0 0.0
    %93 = vmatpush1.msra.mxu0 %v74
    %94 = vmatprep.subr.mxu0 0.0
    %95 = vmatpush1.msra.mxu0 %v75
    %96 = vmatprep.subr.mxu0 0.0
    %97 = vmatpush1.msra.mxu0 %v76
    %98 = vmatprep.subr.mxu0 0.0
    %99 = vmatpush1.msra.mxu0 %v77
    %100 = vmatprep.subr.mxu0 0.0
    %101 = vmatpush1.msra.mxu0 %v78
    %102 = vmatprep.subr.mxu0 0.0
    %103 = vmatpush1.msra.mxu0 %v79
    %104 = vmatprep.subr.mxu0 0.0
    %105 = vmatpush1.msra.mxu0 %v80
    %106 = vmatprep.subr.mxu0 0.0
    %107 = vmatpush1.msra.mxu0 %v81
    %108 = vmatprep.subr.mxu0 0.0
    %109 = vmatpush1.msra.mxu0 %v82
    %110 = vmatprep.subr.mxu0 0.0
    %111 = vmatpush1.msra.mxu0 %v83
    %112 = vmatprep.subr.mxu0 0.0
    %113 = vmatpush1.msra.mxu0 %v84
    %114 = vmatprep.subr.mxu0 0.0
    %115 = vmatpush1.msra.mxu0 %v85
    %116 = vmatprep.subr.mxu0 0.0
    %117 = vmatpush1.msra.mxu0 %v86
    %118 = vmatprep.subr.mxu0 0.0
    %119 = vmatpush1.msra.mxu0 %v87
    %120 = vmatprep.subr.mxu0 0.0
    %121 = vmatpush1.msra.mxu0 0.0
    %122 = vmatprep.subr.mxu0 0.0
    %123 = vmatpush1.msra.mxu0 0.0
    %124 = vmatprep.subr.mxu0 0.0
    %125 = vmatpush1.msra.mxu0 0.0
    %126 = vmatprep.subr.mxu0 0.0
    %127 = vmatpush1.msra.mxu0 0.0
    %128 = vmatprep.subr.mxu0 0.0
    %129 = vmatpush1.msra.mxu0 0.0
    %130 = vmatprep.subr.mxu0 0.0
    %131 = vmatpush1.msra.mxu0 0.0
    %132 = vmatprep.subr.mxu0 0.0
    %133 = vmatpush1.msra.mxu0 0.0
    %134 = vmatprep.subr.mxu0 0.0
    %135 = vmatpush1.msra.mxu0 0.0
    %136 = vmatprep.subr.mxu0 0.0
    %137 = vmatpush1.msra.mxu0 0.0
    %138 = vmatprep.subr.mxu0 0.0
    %139 = vmatpush1.msra.mxu0 0.0
    %140 = vmatprep.subr.mxu0 0.0
    %141 = vmatpush1.msra.mxu0 0.0
    %142 = vmatprep.subr.mxu0 0.0
    %143 = vmatpush1.msra.mxu0 0.0
    %144 = vmatprep.subr.mxu0 0.0
    %145 = vmatpush1.msra.mxu0 0.0
    %146 = vmatprep.subr.mxu0 0.0
    %147 = vmatpush1.msra.mxu0 0.0
    %148 = vmatprep.subr.mxu0 0.0
    %149 = vmatpush1.msra.mxu0 0.0
    %150 = vmatprep.subr.mxu0 0.0
    %151 = vmatpush1.msra.mxu0 0.0
    %152 = vmatprep.mubr.f32.mxu0 0.0
    %153 = vmatmul.mubr.f32.gmra.mrb[0].mxu0 %v70
    %v154 = vpop.f32.mrb[0].mxu0
    %v155 = vadd.f32 0.0, %v154
    %v156 = vpop.f32.mrb[0].mxu0
    %157 = vmatprep.mubr.f32.mxu0 0.0
    %158 = vmatmul.mubr.f32.gmra.mrb[0].mxu0 %v71
    %v159 = vpop.f32.mrb[0].mxu0
    %v160 = vadd.f32 0.0, %v159
    %v161 = vpop.f32.mrb[0].mxu0
    %162 = vdwg.mxu0
    %163 = vst [vmem:[#allocation5] sm:$0xff] %v155
    %164 = vst [vmem:[#allocation5 + $0x8] sm:$0xff] %v160
    // Predicated region
    $region14: #{tpu_custom_call.1} parent=1 // pred_check
      _
    $region15: #{tpu_custom_call.1} parent=1 // pred_check_branch
      %166 = sbr.rel (0) target = $region17
    $region16: #{tpu_custom_call.1} parent=1 // pred_region
      %s168 = ssub.s32 256, 256
      %169 = vsyncadd [#allocation4], %s168
      %s170 = sshll.u32 [#allocation5], 4
      %s171 = int_to_ptr.vmem [resolvable:$true] %s170
      %176 = dma.vmem_to_hbm [thread:$0]  %s171, 256, %s2, [#allocation4], 128, 128, 8
    $region17: #{tpu_custom_call.1} parent=1 // pred_fallthru
      _
    // Predicated region
    $region18: #{tpu_custom_call.1} parent=1 // pred_check
      _
    $region19: #{tpu_custom_call.1} parent=1 // pred_check_branch
      %178 = sbr.rel (0) target = $region21
    $region20: #{tpu_custom_call.1} parent=1 // pred_region
      %179 = dma.done [#allocation4], 256
    $region21: #{tpu_custom_call.1} parent=1 // pred_fallthru
      _
    %180 = vsyncpa [#allocation3], 1
    %181 = vsyncpa [#allocation4], 1

</llo_original>
